<compile_context>
chip_gen: v6e
topology: v6e:2x2x1
jax: 0.10.0
libtpu: 0.0.40
codegen_flags: <defaults>
</compile_context>

<pallas_src>
import jax
import jax.numpy as jnp
from jax.experimental import pallas as pl
from jax.experimental.pallas import tpu as pltpu


def _cdiv(a: int, b: int) -> int:
    return (a + b - 1) // b


def _round_up(n: int, m: int) -> int:
    return _cdiv(n, m) * m


def mlp_kernel(x_ref, w1_ref, b1_ref, w2_ref, b2_ref, out_ref, acc_ref):
    k = pl.program_id(1)

    @pl.when(k == 0)
    def _():
        acc_ref[...] = jnp.zeros_like(acc_ref)

    # x arrives in f32 (no extra wrapper-side HBM pass); cast to bf16 on the
    # VPU right before the MXU, accumulate fc1 partials in f32.
    x_bf = x_ref[...].astype(jnp.bfloat16)
    acc_ref[...] += jnp.dot(x_bf, w1_ref[...],
                            preferred_element_type=jnp.float32)

    @pl.when(k == pl.num_programs(1) - 1)
    def _():
        # Bias + ReLU in f32 on the VPU, fc2 on the MXU, f32 epilogue.
        h = jnp.maximum(acc_ref[...] + b1_ref[...], 0.0)
        logits = jnp.dot(h.astype(w2_ref.dtype), w2_ref[...],
                         preferred_element_type=jnp.float32)
        out_ref[...] = (logits + b2_ref[...]).astype(out_ref.dtype)


def _vmem_limit_bytes() -> int:
    """Generation-aware scoped VMEM limit with headroom (~56 MiB on v7x,
    capped at ~100 MiB on v5e/v6e's 128 MiB)."""
    try:
        cap = pltpu.get_tpu_info().vmem_capacity_bytes
    except Exception:
        cap = 64 * 1024 * 1024  # conservative: v7x physical VMEM per core
    return min(int(cap * 7 // 8), 100 * 1024 * 1024)


def _choose_tiles(b, d_in, hidden, c_pad, budget, block_b=256):
    """Pick (tb, tk) from a VMEM budget. tb targets >=2 batch grid steps
    (v7x megacore); tk shrinks first (K-tiling) before tb."""
    tb = max(16, min(block_b, _round_up(_cdiv(b, 2), 16)))
    d128 = _round_up(d_in, 128)
    tk = d128

    def usage(tb_, tk_, n_k):
        w1_bufs = 1 if n_k == 1 else 2
        return (2 * tb_ * tk_ * 4              # f32 x tile, double-buffered
                + w1_bufs * tk_ * hidden * 2   # bf16 w1 block(s)
                + tb_ * hidden * 4             # f32 acc scratch
                + tb_ * hidden * 2             # bf16 h temp
                + hidden * c_pad * 2           # bf16 w2 (single-buffered)
                + 2 * tb_ * c_pad * 4          # f32 out, double-buffered
                + (hidden + c_pad) * 8)        # biases

    while usage(tb, tk, _cdiv(d128, tk)) > budget:
        if tk > 1024:
            tk = _round_up(tk // 2, 128)
        elif tb > 16:
            tb = max(16, _round_up(tb // 2, 16))
        else:
            break
    n_k = _cdiv(d128, tk)
    tk = _round_up(_cdiv(d128, n_k), 128)      # even, lane-aligned K tiles
    return tb, tk, n_k, n_k * tk


def mlp_classifier_forward(x_nchw, w1, b1, w2, b2, *, block_b: int = 256):
    """x_nchw: (b, 3, H, W) float32. Returns (b, num_classes) float32 logits."""
    b = x_nchw.shape[0]
    d_in, hidden = w1.shape
    num_classes = w2.shape[1]

    # Matches torch's x.view(b, -1) for contiguous NCHW input.
    x_flat = x_nchw.reshape(b, -1)
    assert x_flat.shape[1] == d_in

    c_pad = _round_up(num_classes, 128)
    vmem_limit = _vmem_limit_bytes()
    tb, tk, n_k, d_pad = _choose_tiles(b, d_in, hidden, c_pad,
                                       budget=int(vmem_limit * 0.9),
                                       block_b=block_b)
    b_pad = _round_up(b, tb)

    # Pad only when needed (zero rows/cols; padded logits sliced off below).
    if b_pad != b or d_pad != d_in:
        x_flat = jnp.pad(x_flat, ((0, b_pad - b), (0, d_pad - d_in)))
    w1_p = w1 if d_pad == d_in else jnp.pad(w1, ((0, d_pad - d_in), (0, 0)))

    # Weights as bf16 MXU operands (f32 accumulation inside the kernel).
    w1_bf = w1_p.astype(jnp.bfloat16)
    w2_p = jnp.zeros((hidden, c_pad), jnp.bfloat16).at[:, :num_classes].set(
        w2.astype(jnp.bfloat16))
    b1_2d = b1.reshape(1, hidden).astype(jnp.float32)
    b2_p = jnp.zeros((1, c_pad), jnp.float32).at[0, :num_classes].set(
        b2.astype(jnp.float32))

    grid = (b_pad // tb, n_k)
    flops = 2 * b_pad * (d_pad * hidden + hidden * c_pad)
    bytes_accessed = (b_pad * d_pad * 4
                      + d_pad * hidden * 2 * (1 if n_k == 1 else b_pad // tb)
                      + hidden * c_pad * 2 + (hidden + c_pad) * 4
                      + b_pad * c_pad * 4)

    # w1 only needs double-buffering when its block index changes with k.
    w1_mode = pl.Buffered(1) if n_k == 1 else pl.Buffered(2)

    out = pl.pallas_call(
        mlp_kernel,
        out_shape=jax.ShapeDtypeStruct((b_pad, c_pad), jnp.float32),
        grid=grid,
        in_specs=[
            # x (f32) streams / double-buffers per grid step.
            pl.BlockSpec((tb, tk), lambda i, k: (i, k)),
            pl.BlockSpec((tk, hidden), lambda i, k: (k, 0),
                         pipeline_mode=w1_mode),
            # Constant-index biases / fc2 weight: single-buffered residents.
            pl.BlockSpec((1, hidden), lambda i, k: (0, 0),
                         pipeline_mode=pl.Buffered(1)),
            pl.BlockSpec((hidden, c_pad), lambda i, k: (0, 0),
                         pipeline_mode=pl.Buffered(1)),
            pl.BlockSpec((1, c_pad), lambda i, k: (0, 0),
                         pipeline_mode=pl.Buffered(1)),
        ],
        out_specs=pl.BlockSpec((tb, c_pad), lambda i, k: (i, 0)),
        scratch_shapes=[pltpu.VMEM((tb, hidden), jnp.float32)],
        compiler_params=pltpu.CompilerParams(
            dimension_semantics=("parallel", "arbitrary"),
            vmem_limit_bytes=vmem_limit),
        cost_estimate=pl.CostEstimate(
            flops=flops, transcendentals=0, bytes_accessed=bytes_accessed),
    )(x_flat, w1_bf, b1_2d, w2_p, b2_p)

    # Slice off batch padding and the zero-padded class columns.
    return out[:b, :num_classes]


def init_params(key, h, w, hidden, num_classes):
    """Deterministic synthetic params matching nn.Linear shapes (transposed)."""
    d_in = h * w * 3
    k1, k2, k3, k4 = jax.random.split(key, 4)
    s1 = 1.0 / jnp.sqrt(d_in)
    s2 = 1.0 / jnp.sqrt(hidden)
    w1 = jax.random.uniform(k1, (d_in, hidden), jnp.float32, -s1, s1)
    b1 = jax.random.uniform(k2, (hidden,), jnp.float32, -s1, s1)
    w2 = jax.random.uniform(k3, (hidden, num_classes), jnp.float32, -s2, s2)
    b2 = jax.random.uniform(k4, (num_classes,), jnp.float32, -s2, s2)
    return w1, b1, w2, b2


if __name__ == "__main__":
    # Small shapes consistent with the module: (b, 3, H, W) image input.
    batch, H, W = 2, 16, 16
    hidden, num_classes = 128, 6

    key = jax.random.PRNGKey(0)
    kx, kp = jax.random.split(key)
    x = jax.random.normal(kx, (batch, 3, H, W), jnp.float32)
    w1, b1, w2, b2 = init_params(kp, H, W, hidden, num_classes)

    logits = jax.block_until_ready(mlp_classifier_forward(x, w1, b1, w2, b2))
    assert logits.shape == (batch, num_classes)

    # Pure-JAX reference with matching bf16-operand / f32-accumulate semantics.
    x_flat = x.reshape(batch, -1)
    h_ref = jnp.dot(x_flat.astype(jnp.bfloat16), w1.astype(jnp.bfloat16),
                    preferred_element_type=jnp.float32) + b1
    h_ref = jnp.maximum(h_ref, 0.0)
    ref = jnp.dot(h_ref.astype(jnp.bfloat16), w2.astype(jnp.bfloat16),
                  preferred_element_type=jnp.float32) + b2
    assert jnp.allclose(logits, ref, atol=1e-2, rtol=1e-2), (
        jnp.max(jnp.abs(logits - ref)))

    # Looser sanity check against the full-f32 math of the PyTorch module
    # (documented tolerance; bf16 MXU operands are an intentional deviation).
    ref_f32 = jnp.maximum(x_flat @ w1 + b1, 0.0) @ w2 + b2
    assert jnp.allclose(logits, ref_f32, atol=5e-2, rtol=5e-2)

    print("KERNEL_OK")
</pallas_src>

<mosaic_0001>
module attributes {stable_mosaic.version = 11 : i64} {
  func.func @mlp_kernel(%arg0: i32, %arg1: i32, %arg2: memref<16x768xf32, #tpu.memory_space<vmem>>, %arg3: memref<768x128xbf16, #tpu.memory_space<vmem>>, %arg4: memref<1x128xf32, #tpu.memory_space<vmem>>, %arg5: memref<128x128xbf16, #tpu.memory_space<vmem>>, %arg6: memref<1x128xf32, #tpu.memory_space<vmem>>, %arg7: memref<16x128xf32, #tpu.memory_space<vmem>>, %arg8: memref<16x128xf32, #tpu.memory_space<vmem>>) attributes {dimension_semantics = [#tpu.dimension_semantics<parallel>, #tpu.dimension_semantics<arbitrary>], iteration_bounds = array<i64: 1, 1>, scalar_prefetch = 0 : i64, scratch_operands = 1 : i64, tpu.core_type = #tpu.core_type<tc>, window_params = [{transform_indices = @transform_0, window_bounds = array<i64: 16, 768>}, {pipeline_mode = #tpu.pipeline_mode<synchronous>, transform_indices = @transform_1, window_bounds = array<i64: 768, 128>}, {pipeline_mode = #tpu.pipeline_mode<synchronous>, transform_indices = @transform_2, window_bounds = array<i64: 1, 128>}, {pipeline_mode = #tpu.pipeline_mode<synchronous>, transform_indices = @transform_3, window_bounds = array<i64: 128, 128>}, {pipeline_mode = #tpu.pipeline_mode<synchronous>, transform_indices = @transform_4, window_bounds = array<i64: 1, 128>}, {transform_indices = @transform_5, window_bounds = array<i64: 16, 128>}]} {
    %c0_i32 = arith.constant 0 : i32
    %0 = arith.cmpi eq, %arg1, %c0_i32 : i32
    %1 = arith.extui %0 : i1 to i32
    %c0_i32_0 = arith.constant 0 : i32
    %2 = arith.cmpi ne, %1, %c0_i32_0 : i32
    scf.if %2 {
      %cst_10 = arith.constant 0.000000e+00 : f32
      %13 = vector.broadcast %cst_10 : f32 to vector<16x128xf32>
      %c0_11 = arith.constant 0 : index
      %c0_12 = arith.constant 0 : index
      %14 = vector.load %arg8[%c0_11, %c0_12] : memref<16x128xf32, #tpu.memory_space<vmem>>, vector<16x128xf32>
      tpu.vector_store %arg8[%c0_11, %c0_12], %13 {strides = array<i32>} : memref<16x128xf32, #tpu.memory_space<vmem>>, vector<16x128xf32>,
    } else {
    }
    %c0 = arith.constant 0 : index
    %c0_1 = arith.constant 0 : index
    %3 = vector.load %arg2[%c0, %c0_1] : memref<16x768xf32, #tpu.memory_space<vmem>>, vector<16x768xf32>
    %4 = arith.truncf %3 : vector<16x768xf32> to vector<16x768xbf16>
    %c0_2 = arith.constant 0 : index
    %c0_3 = arith.constant 0 : index
    %5 = vector.load %arg8[%c0_2, %c0_3] : memref<16x128xf32, #tpu.memory_space<vmem>>, vector<16x128xf32>
    %c0_4 = arith.constant 0 : index
    %c0_5 = arith.constant 0 : index
    %6 = vector.load %arg3[%c0_4, %c0_5] : memref<768x128xbf16, #tpu.memory_space<vmem>>, vector<768x128xbf16>
    %cst = arith.constant dense<0.000000e+00> : vector<16x128xf32>
    %7 = tpu.matmul %4, %6, %cst {dimension_numbers = #tpu.dot_dimension_numbers<[1], [0], [0], [1], [0, 0, 1, 1], [], []>} : vector<16x768xbf16>, vector<768x128xbf16>, vector<16x128xf32> -> vector<16x128xf32>
    %8 = arith.addf %5, %7 : vector<16x128xf32>
    %c0_6 = arith.constant 0 : index
    %c0_7 = arith.constant 0 : index
    %9 = vector.load %arg8[%c0_6, %c0_7] : memref<16x128xf32, #tpu.memory_space<vmem>>, vector<16x128xf32>
    tpu.vector_store %arg8[%c0_6, %c0_7], %8 {strides = array<i32>} : memref<16x128xf32, #tpu.memory_space<vmem>>, vector<16x128xf32>,
    %c0_i32_8 = arith.constant 0 : i32
    %10 = arith.cmpi eq, %arg1, %c0_i32_8 : i32
    %11 = arith.extui %10 : i1 to i32
    %c0_i32_9 = arith.constant 0 : i32
    %12 = arith.cmpi ne, %11, %c0_i32_9 : i32
    scf.if %12 {
      %c0_10 = arith.constant 0 : index
      %c0_11 = arith.constant 0 : index
      %13 = vector.load %arg8[%c0_10, %c0_11] : memref<16x128xf32, #tpu.memory_space<vmem>>, vector<16x128xf32>
      %c0_12 = arith.constant 0 : index
      %c0_13 = arith.constant 0 : index
      %14 = vector.load %arg4[%c0_12, %c0_13] : memref<1x128xf32, #tpu.memory_space<vmem>>, vector<1x128xf32>
      %15 = vector.broadcast %14 : vector<1x128xf32> to vector<16x128xf32>
      %16 = arith.addf %13, %15 : vector<16x128xf32>
      %cst_14 = arith.constant 0.000000e+00 : f32
      %17 = vector.broadcast %cst_14 : f32 to vector<16x128xf32>
      %18 = arith.maximumf %16, %17 : vector<16x128xf32>
      %19 = arith.truncf %18 : vector<16x128xf32> to vector<16x128xbf16>
      %c0_15 = arith.constant 0 : index
      %c0_16 = arith.constant 0 : index
      %20 = vector.load %arg5[%c0_15, %c0_16] : memref<128x128xbf16, #tpu.memory_space<vmem>>, vector<128x128xbf16>
      %cst_17 = arith.constant dense<0.000000e+00> : vector<16x128xf32>
      %21 = tpu.matmul %19, %20, %cst_17 {dimension_numbers = #tpu.dot_dimension_numbers<[1], [0], [0], [1], [0, 0, 1, 1], [], []>} : vector<16x128xbf16>, vector<128x128xbf16>, vector<16x128xf32> -> vector<16x128xf32>
      %c0_18 = arith.constant 0 : index
      %c0_19 = arith.constant 0 : index
      %22 = vector.load %arg6[%c0_18, %c0_19] : memref<1x128xf32, #tpu.memory_space<vmem>>, vector<1x128xf32>
      %23 = vector.broadcast %22 : vector<1x128xf32> to vector<16x128xf32>
      %24 = arith.addf %21, %23 : vector<16x128xf32>
      %c0_20 = arith.constant 0 : index
      %c0_21 = arith.constant 0 : index
      %25 = vector.load %arg7[%c0_20, %c0_21] : memref<16x128xf32, #tpu.memory_space<vmem>>, vector<16x128xf32>
      tpu.vector_store %arg7[%c0_20, %c0_21], %24 {strides = array<i32>} : memref<16x128xf32, #tpu.memory_space<vmem>>, vector<16x128xf32>,
    } else {
    }
    return
  }
  func.func @transform_0(%arg0: i32, %arg1: i32) -> (i32, i32) {
    %c0_i32 = arith.constant 0 : i32
    return %arg0, %arg1 : i32, i32
  }
  func.func @transform_1(%arg0: i32, %arg1: i32) -> (i32, i32) {
    %c0_i32 = arith.constant 0 : i32
    %c0_i32_0 = arith.constant 0 : i32
    return %arg1, %c0_i32 : i32, i32
  }
  func.func @transform_2(%arg0: i32, %arg1: i32) -> (i32, i32) {
    %c0_i32 = arith.constant 0 : i32
    %c0_i32_0 = arith.constant 0 : i32
    %c0_i32_1 = arith.constant 0 : i32
    return %c0_i32, %c0_i32_0 : i32, i32
  }
  func.func @transform_3(%arg0: i32, %arg1: i32) -> (i32, i32) {
    %c0_i32 = arith.constant 0 : i32
    %c0_i32_0 = arith.constant 0 : i32
    %c0_i32_1 = arith.constant 0 : i32
    return %c0_i32, %c0_i32_0 : i32, i32
  }
  func.func @transform_4(%arg0: i32, %arg1: i32) -> (i32, i32) {
    %c0_i32 = arith.constant 0 : i32
    %c0_i32_0 = arith.constant 0 : i32
    %c0_i32_1 = arith.constant 0 : i32
    return %c0_i32, %c0_i32_0 : i32, i32
  }
  func.func @transform_5(%arg0: i32, %arg1: i32) -> (i32, i32) {
    %c0_i32 = arith.constant 0 : i32
    %c0_i32_0 = arith.constant 0 : i32
    return %arg0, %c0_i32 : i32, i32
  }
}

</mosaic_0001>

<llo_original>
// kernel: tpu_custom_call.1
$region0: #{tpu_custom_call.1}
  #allocation0 [shape = 'u32[]', space=smem, size = 0x4, offset = 0x4, fixed_abs, tag = 'smem constant byte address 0x4 - core index']
  #allocation1 [shape = 'u32[144,128]{1,0:T(1,128)}', space=vmem, size = 0x12000, scoped, tag = 'internal scratch']
  #allocation2 [shape = 'f32[16,128]{1,0:T(8,128)}', space=vmem, size = 0x2000, scoped, tag = 'scratch operand']
  %s0 = inlined_call_operand.hbm [shape: f32[16,768], index: 0, kind: input, shape index: {}]
  %s1 = inlined_call_operand.hbm [shape: bf16[768,128], index: 1, kind: input, shape index: {}]
  %s2 = inlined_call_operand.vmem [shape: f32[1,128], index: 2, kind: input, shape index: {}]
  %s3 = inlined_call_operand.hbm [shape: bf16[128,128], index: 3, kind: input, shape index: {}]
  %s4 = inlined_call_operand.vmem [shape: f32[1,128], index: 4, kind: input, shape index: {}]
  %s5 = inlined_call_operand.hbm [shape: f32[16,128], index: 5, kind: output, shape index: {}]
  %s6 = sld [smem:[#allocation0]]
  $region50: #{tpu_custom_call.1} parent=0
    _
  %s8 = ssub.s32 1, %s6
  %s9 = scalar_select 0, %s8, %s6
  $region1: #{tpu_custom_call.1} parent=0
    #allocation3 [shape = 'u8[49152]{0}', space=vmem, size = 0xc000, scoped, tag = 'input window, operand 0, single buffered']
    #allocation4 [shape = 's32[1]{0}', space=sflag, size = 0x4, scoped, tag = 'scoped memory for tpu_custom_call.1']
    #allocation5 [shape = 's32[1]{0}', space=sflag, size = 0x4, scoped, tag = 'scoped memory for tpu_custom_call.1']
    #allocation6 [shape = 'u8[196608]{0}', space=vmem, size = 0x30000, scoped, tag = 'input window, operand 1, single buffered']
    #allocation7 [shape = 's32[1]{0}', space=sflag, size = 0x4, scoped, tag = 'scoped memory for tpu_custom_call.1']
    #allocation8 [shape = 'u8[32768]{0}', space=vmem, size = 0x8000, scoped, tag = 'input window, operand 3, single buffered']
    #allocation9 [shape = 'u8[8192]{0}', space=vmem, size = 0x2000, scoped, tag = 'output window, operand 0, single buffered']
    %10 = vsyncpa [#allocation4], 0
    %11 = vsyncpa [#allocation7], 0
    %12 = vsyncpa [#allocation5], 0
    // Predicated region
    $region2: #{tpu_custom_call.1} parent=1 // pred_check
      _
    $region3: #{tpu_custom_call.1} parent=1 // pred_check_branch
      %14 = sbr.rel (0) target = $region5
    $region4: #{tpu_custom_call.1} parent=1 // pred_region
      %s16 = ssub.s32 1536, 1536
      %17 = vsyncadd [#allocation4], %s16
      %s18 = sshll.u32 [#allocation3], 4
      %s19 = int_to_ptr.vmem [resolvable:$true] %s18
      %24 = dma.hbm_to_vmem [thread:$0]  %s0, 1536, %s19, [#allocation4], 768, 768, 48
    $region5: #{tpu_custom_call.1} parent=1 // pred_fallthru
      _
    // Predicated region
    $region6: #{tpu_custom_call.1} parent=1 // pred_check
      _
    $region7: #{tpu_custom_call.1} parent=1 // pred_check_branch
      %26 = sbr.rel (0) target = $region9
    $region8: #{tpu_custom_call.1} parent=1 // pred_region
      %s28 = ssub.s32 6144, 6144
      %29 = vsyncadd [#allocation7], %s28
      %s30 = sshll.u32 [#allocation6], 4
      %s31 = int_to_ptr.vmem [resolvable:$true] %s30
      %36 = dma.hbm_to_vmem [thread:$0]  %s1, 6144, %s31, [#allocation7], 64, 64, 4
    $region9: #{tpu_custom_call.1} parent=1 // pred_fallthru
      _
    // Predicated region
    $region10: #{tpu_custom_call.1} parent=1 // pred_check
      _
    $region11: #{tpu_custom_call.1} parent=1 // pred_check_branch
      %38 = sbr.rel (0) target = $region13
    $region12: #{tpu_custom_call.1} parent=1 // pred_region
      _
    $region13: #{tpu_custom_call.1} parent=1 // pred_fallthru
      _
    // Predicated region
    $region14: #{tpu_custom_call.1} parent=1 // pred_check
      _
    $region15: #{tpu_custom_call.1} parent=1 // pred_check_branch
      %40 = sbr.rel (0) target = $region17
    $region16: #{tpu_custom_call.1} parent=1 // pred_region
      %s42 = ssub.s32 1024, 1024
      %43 = vsyncadd [#allocation7], %s42
      %s44 = sshll.u32 [#allocation8], 4
      %s45 = int_to_ptr.vmem [resolvable:$true] %s44
      %50 = dma.hbm_to_vmem [thread:$0]  %s3, 1024, %s45, [#allocation7], 64, 64, 4
    $region17: #{tpu_custom_call.1} parent=1 // pred_fallthru
      _
    // Predicated region
    $region18: #{tpu_custom_call.1} parent=1 // pred_check
      _
    $region19: #{tpu_custom_call.1} parent=1 // pred_check_branch
      %52 = sbr.rel (0) target = $region21
    $region20: #{tpu_custom_call.1} parent=1 // pred_region
      _
    $region21: #{tpu_custom_call.1} parent=1 // pred_fallthru
      _
    // Predicated region
    $region22: #{tpu_custom_call.1} parent=1 // pred_check
      _
    $region23: #{tpu_custom_call.1} parent=1 // pred_check_branch
      %54 = sbr.rel (0) target = $region25
    $region24: #{tpu_custom_call.1} parent=1 // pred_region
      %55 = dma.done [#allocation4], 1536
    $region25: #{tpu_custom_call.1} parent=1 // pred_fallthru
      _
    // Predicated region
    $region26: #{tpu_custom_call.1} parent=1 // pred_check
      _
    $region27: #{tpu_custom_call.1} parent=1 // pred_check_branch
      %57 = sbr.rel (0) target = $region29
    $region28: #{tpu_custom_call.1} parent=1 // pred_region
      %58 = dma.done [#allocation7], 6144
    $region29: #{tpu_custom_call.1} parent=1 // pred_fallthru
      _
    // Predicated region
    $region30: #{tpu_custom_call.1} parent=1 // pred_check
      _
    $region31: #{tpu_custom_call.1} parent=1 // pred_check_branch
      %60 = sbr.rel (0) target = $region33
    $region32: #{tpu_custom_call.1} parent=1 // pred_region
      %61 = dma.done [#allocation7], 1024
    $region33: #{tpu_custom_call.1} parent=1 // pred_fallthru
      _
    %p63 = scmp.eq.s32.totalorder 0, 0
    // Predicated region
    $region34: #{tpu_custom_call.1} parent=1 // pred_check
      %p64 = pneg %p63
    $region35: #{tpu_custom_call.1} parent=1 // pred_check_branch
      %66 = sbr.rel (%p64) target = $region37
    $region36: #{tpu_custom_call.1} parent=1 // pred_region
      %67 = vst [vmem:[#allocation2] sm:$0xff] 0.0
      %68 = vst [vmem:[#allocation2 + $0x8] sm:$0xff] 0.0
    $region37: #{tpu_custom_call.1} parent=1 // pred_fallthru
      _
    %v69 = vld [vmem:[#allocation3] sm:$0xff]
    %v70 = vld [vmem:[#allocation3 + $0x8] sm:$0xff]
    %v71 = vld [vmem:[#allocation3 + $0x10] sm:$0xff]
    %v72 = vld [vmem:[#allocation3 + $0x18] sm:$0xff]
    %v73 = vld [vmem:[#allocation3 + $0x20] sm:$0xff]
    %v74 = vld [vmem:[#allocation3 + $0x28] sm:$0xff]
    %v75 = vld [vmem:[#allocation3 + $0x30] sm:$0xff]
    %v76 = vld [vmem:[#allocation3 + $0x38] sm:$0xff]
    %v77 = vld [vmem:[#allocation3 + $0x40] sm:$0xff]
    %v78 = vld [vmem:[#allocation3 + $0x48] sm:$0xff]
    %v79 = vld [vmem:[#allocation3 + $0x50] sm:$0xff]
    %v80 = vld [vmem:[#allocation3 + $0x58] sm:$0xff]
    %v81 = vpack.c.bf16 %v75, %v69
    %v82 = vpack.c.bf16 %v76, %v70
    %v83 = vpack.c.bf16 %v77, %v71
    %v84 = vpack.c.bf16 %v78, %v72
    %v85 = vpack.c.bf16 %v79, %v73
    %v86 = vpack.c.bf16 %v80, %v74
    %v87 = vld [vmem:[#allocation2] sm:$0xff]
    %v88 = vld [vmem:[#allocation2 + $0x8] sm:$0xff]
    %v89 = vld [vmem:[#allocation6] sm:$0xf]
    %v90 = vld [vmem:[#allocation6 + $0x4] sm:$0xf]
    %v91 = vld [vmem:[#allocation6 + $0x8] sm:$0xf]
    %v92 = vld [vmem:[#allocation6 + $0xc] sm:$0xf]
    %v93 = vld [vmem:[#allocation6 + $0x10] sm:$0xf]
    %v94 = vld [vmem:[#allocation6 + $0x14] sm:$0xf]
    %v95 = vld [vmem:[#allocation6 + $0x18] sm:$0xf]
    %v96 = vld [vmem:[#allocation6 + $0x1c] sm:$0xf]
    %v97 = vld [vmem:[#allocation6 + $0x20] sm:$0xf]
    %v98 = vld [vmem:[#allocation6 + $0x24] sm:$0xf]
    %v99 = vld [vmem:[#allocation6 + $0x28] sm:$0xf]
    %v100 = vld [vmem:[#allocation6 + $0x2c] sm:$0xf]
    %v101 = vld [vmem:[#allocation6 + $0x30] sm:$0xf]
    %v102 = vld [vmem:[#allocation6 + $0x34] sm:$0xf]
    %v103 = vld [vmem:[#allocation6 + $0x38] sm:$0xf]
    %v104 = vld [vmem:[#allocation6 + $0x3c] sm:$0xf]
    %v105 = vld [vmem:[#allocation6 + $0x40] sm:$0xf]
    %v106 = vld [vmem:[#allocation6 + $0x44] sm:$0xf]
    %v107 = vld [vmem:[#allocation6 + $0x48] sm:$0xf]
    %v108 = vld [vmem:[#allocation6 + $0x4c] sm:$0xf]
    %v109 = vld [vmem:[#allocation6 + $0x50] sm:$0xf]
    %v110 = vld [vmem:[#allocation6 + $0x54] sm:$0xf]
    %v111 = vld [vmem:[#allocation6 + $0x58] sm:$0xf]
    %v112 = vld [vmem:[#allocation6 + $0x5c] sm:$0xf]
    %v113 = vld [vmem:[#allocation6 + $0x60] sm:$0xf]
    %v114 = vld [vmem:[#allocation6 + $0x64] sm:$0xf]
    %v115 = vld [vmem:[#allocation6 + $0x68] sm:$0xf]
    %v116 = vld [vmem:[#allocation6 + $0x6c] sm:$0xf]
    %v117 = vld [vmem:[#allocation6 + $0x70] sm:$0xf]
    %v118 = vld [vmem:[#allocation6 + $0x74] sm:$0xf]
    %v119 = vld [vmem:[#allocation6 + $0x78] sm:$0xf]
    %v120 = vld [vmem:[#allocation6 + $0x7c] sm:$0xf]
    %v121 = vld [vmem:[#allocation6 + $0x80] sm:$0xf]
    %v122 = vld [vmem:[#allocation6 + $0x84] sm:$0xf]
    %v123 = vld [vmem:[#allocation6 + $0x88] sm:$0xf]
    %v124 = vld [vmem:[#allocation6 + $0x8c] sm:$0xf]
    %v125 = vld [vmem:[#allocation6 + $0x90] sm:$0xf]
    %v126 = vld [vmem:[#allocation6 + $0x94] sm:$0xf]
    %v127 = vld [vmem:[#allocation6 + $0x98] sm:$0xf]
    %v128 = vld [vmem:[#allocation6 + $0x9c] sm:$0xf]
    %v129 = vld [vmem:[#allocation6 + $0xa0] sm:$0xf]
    %v130 = vld [vmem:[#allocation6 + $0xa4] sm:$0xf]
    %v131 = vld [vmem:[#allocation6 + $0xa8] sm:$0xf]
    %v132 = vld [vmem:[#allocation6 + $0xac] sm:$0xf]
    %v133 = vld [vmem:[#allocation6 + $0xb0] sm:$0xf]
    %v134 = vld [vmem:[#allocation6 + $0xb4] sm:$0xf]
    %v135 = vld [vmem:[#allocation6 + $0xb8] sm:$0xf]
    %v136 = vld [vmem:[#allocation6 + $0xbc] sm:$0xf]
    %v137 = vld [vmem:[#allocation6 + $0xc0] sm:$0xf]
    %v138 = vld [vmem:[#allocation6 + $0xc4] sm:$0xf]
    %v139 = vld [vmem:[#allocation6 + $0xc8] sm:$0xf]
    %v140 = vld [vmem:[#allocation6 + $0xcc] sm:$0xf]
    %v141 = vld [vmem:[#allocation6 + $0xd0] sm:$0xf]
    %v142 = vld [vmem:[#allocation6 + $0xd4] sm:$0xf]
    %v143 = vld [vmem:[#allocation6 + $0xd8] sm:$0xf]
    %v144 = vld [vmem:[#allocation6 + $0xdc] sm:$0xf]
    %v145 = vld [vmem:[#allocation6 + $0xe0] sm:$0xf]
    %v146 = vld [vmem:[#allocation6 + $0xe4] sm:$0xf]
    %v147 = vld [vmem:[#allocation6 + $0xe8] sm:$0xf]
    %v148 = vld [vmem:[#allocation6 + $0xec] sm:$0xf]
    %v149 = vld [vmem:[#allocation6 + $0xf0] sm:$0xf]
    %v150 = vld [vmem:[#allocation6 + $0xf4] sm:$0xf]
    %v151 = vld [vmem:[#allocation6 + $0xf8] sm:$0xf]
    %v152 = vld [vmem:[#allocation6 + $0xfc] sm:$0xf]
    %v153 = vld [vmem:[#allocation6 + $0x100] sm:$0xf]
    %v154 = vld [vmem:[#allocation6 + $0x104] sm:$0xf]
    %v155 = vld [vmem:[#allocation6 + $0x108] sm:$0xf]
    %v156 = vld [vmem:[#allocation6 + $0x10c] sm:$0xf]
    %v157 = vld [vmem:[#allocation6 + $0x110] sm:$0xf]
    %v158 = vld [vmem:[#allocation6 + $0x114] sm:$0xf]
    %v159 = vld [vmem:[#allocation6 + $0x118] sm:$0xf]
    %v160 = vld [vmem:[#allocation6 + $0x11c] sm:$0xf]
    %v161 = vld [vmem:[#allocation6 + $0x120] sm:$0xf]
    %v162 = vld [vmem:[#allocation6 + $0x124] sm:$0xf]
    %v163 = vld [vmem:[#allocation6 + $0x128] sm:$0xf]
    %v164 = vld [vmem:[#allocation6 + $0x12c] sm:$0xf]
    %v165 = vld [vmem:[#allocation6 + $0x130] sm:$0xf]
    %v166 = vld [vmem:[#allocation6 + $0x134] sm:$0xf]
    %v167 = vld [vmem:[#allocation6 + $0x138] sm:$0xf]
    %v168 = vld [vmem:[#allocation6 + $0x13c] sm:$0xf]
    %v169 = vld [vmem:[#allocation6 + $0x140] sm:$0xf]
    %v170 = vld [vmem:[#allocation6 + $0x144] sm:$0xf]
    %v171 = vld [vmem:[#allocation6 + $0x148] sm:$0xf]
    %v172 = vld [vmem:[#allocation6 + $0x14c] sm:$0xf]
    %v173 = vld [vmem:[#allocation6 + $0x150] sm:$0xf]
    %v174 = vld [vmem:[#allocation6 + $0x154] sm:$0xf]
    %v175 = vld [vmem:[#allocation6 + $0x158] sm:$0xf]
    %v176 = vld [vmem:[#allocation6 + $0x15c] sm:$0xf]
    %v177 = vld [vmem:[#allocation6 + $0x160] sm:$0xf]
    %v178 = vld [vmem:[#allocation6 + $0x164] sm:$0xf]
    %v179 = vld [vmem:[#allocation6 + $0x168] sm:$0xf]
    %v180 = vld [vmem:[#allocation6 + $0x16c] sm:$0xf]
    %v181 = vld [vmem:[#allocation6 + $0x170] sm:$0xf]
    %v182 = vld [vmem:[#allocation6 + $0x174] sm:$0xf]
    %v183 = vld [vmem:[#allocation6 + $0x178] sm:$0xf]
    %v184 = vld [vmem:[#allocation6 + $0x17c] sm:$0xf]
    %v281 = vunpack.c.l.b16 %v89
    %v282 = vunpack.c.l.b16 %v90
    %v283 = vunpack.c.l.b16 %v91
    %v284 = vunpack.c.l.b16 %v92
    %v285 = vunpack.c.l.b16 %v93
    %v286 = vunpack.c.l.b16 %v94
    %v287 = vunpack.c.l.b16 %v95
    %v288 = vunpack.c.l.b16 %v96
    %v289 = vunpack.c.l.b16 %v97
    %v290 = vunpack.c.l.b16 %v98
    %v291 = vunpack.c.l.b16 %v99
    %v292 = vunpack.c.l.b16 %v100
    %v293 = vunpack.c.l.b16 %v101
    %v294 = vunpack.c.l.b16 %v102
    %v295 = vunpack.c.l.b16 %v103
    %v296 = vunpack.c.l.b16 %v104
    %v297 = vunpack.c.l.b16 %v105
    %v298 = vunpack.c.l.b16 %v106
    %v299 = vunpack.c.l.b16 %v107
    %v300 = vunpack.c.l.b16 %v108
    %v301 = vunpack.c.l.b16 %v109
    %v302 = vunpack.c.l.b16 %v110
    %v303 = vunpack.c.l.b16 %v111
    %v304 = vunpack.c.l.b16 %v112
    %v305 = vunpack.c.l.b16 %v113
    %v306 = vunpack.c.l.b16 %v114
    %v307 = vunpack.c.l.b16 %v115
    %v308 = vunpack.c.l.b16 %v116
    %v309 = vunpack.c.l.b16 %v117
    %v310 = vunpack.c.l.b16 %v118
    %v311 = vunpack.c.l.b16 %v119
    %v312 = vunpack.c.l.b16 %v120
    %v313 = vunpack.c.l.b16 %v121
    %v314 = vunpack.c.l.b16 %v122
    %v315 = vunpack.c.l.b16 %v123
    %v316 = vunpack.c.l.b16 %v124
    %v317 = vunpack.c.l.b16 %v125
    %v318 = vunpack.c.l.b16 %v126
    %v319 = vunpack.c.l.b16 %v127
    %v320 = vunpack.c.l.b16 %v128
    %v321 = vunpack.c.l.b16 %v129
    %v322 = vunpack.c.l.b16 %v130
    %v323 = vunpack.c.l.b16 %v131
    %v324 = vunpack.c.l.b16 %v132
    %v325 = vunpack.c.l.b16 %v133
    %v326 = vunpack.c.l.b16 %v134
    %v327 = vunpack.c.l.b16 %v135
    %v328 = vunpack.c.l.b16 %v136
    %v329 = vunpack.c.l.b16 %v137
    %v330 = vunpack.c.l.b16 %v138
    %v331 = vunpack.c.l.b16 %v139
    %v332 = vunpack.c.l.b16 %v140
    %v333 = vunpack.c.l.b16 %v141
    %v334 = vunpack.c.l.b16 %v142
    %v335 = vunpack.c.l.b16 %v143
    %v336 = vunpack.c.l.b16 %v144
    %v337 = vunpack.c.l.b16 %v145
    %v338 = vunpack.c.l.b16 %v146
    %v339 = vunpack.c.l.b16 %v147
    %v340 = vunpack.c.l.b16 %v148
    %v341 = vunpack.c.l.b16 %v149
    %v342 = vunpack.c.l.b16 %v150
    %v343 = vunpack.c.l.b16 %v151
    %v344 = vunpack.c.l.b16 %v152
    %v345 = vunpack.c.l.b16 %v153
    %v346 = vunpack.c.l.b16 %v154
    %v347 = vunpack.c.l.b16 %v155
    %v348 = vunpack.c.l.b16 %v156
    %v349 = vunpack.c.l.b16 %v157
    %v350 = vunpack.c.l.b16 %v158
    %v351 = vunpack.c.l.b16 %v159
    %v352 = vunpack.c.l.b16 %v160
    %v353 = vunpack.c.l.b16 %v161
    %v354 = vunpack.c.l.b16 %v162
    %v355 = vunpack.c.l.b16 %v163
    %v356 = vunpack.c.l.b16 %v164
    %v357 = vunpack.c.l.b16 %v165
    %v358 = vunpack.c.l.b16 %v166
    %v359 = vunpack.c.l.b16 %v167
    %v360 = vunpack.c.l.b16 %v168
    %v361 = vunpack.c.l.b16 %v169
    %v362 = vunpack.c.l.b16 %v170
    %v363 = vunpack.c.l.b16 %v171
    %v364 = vunpack.c.l.b16 %v172
    %v365 = vunpack.c.l.b16 %v173
    %v366 = vunpack.c.l.b16 %v174
    %v367 = vunpack.c.l.b16 %v175
    %v368 = vunpack.c.l.b16 %v176
    %v369 = vunpack.c.l.b16 %v177
    %v370 = vunpack.c.l.b16 %v178
    %v371 = vunpack.c.l.b16 %v179
    %v372 = vunpack.c.l.b16 %v180
    %v373 = vunpack.c.l.b16 %v181
    %v374 = vunpack.c.l.b16 %v182
    %v375 = vunpack.c.l.b16 %v183
    %v376 = vunpack.c.l.b16 %v184
    %v377 = vpack.c.b16 %v282, %v281
    %v378 = vpack.c.b16 %v284, %v283
    %v379 = vpack.c.b16 %v286, %v285
    %v380 = vpack.c.b16 %v288, %v287
    %v381 = vpack.c.b16 %v290, %v289
    %v382 = vpack.c.b16 %v292, %v291
    %v383 = vpack.c.b16 %v294, %v293
    %v384 = vpack.c.b16 %v296, %v295
    %v385 = vpack.c.b16 %v298, %v297
    %v386 = vpack.c.b16 %v300, %v299
    %v387 = vpack.c.b16 %v302, %v301
    %v388 = vpack.c.b16 %v304, %v303
    %v389 = vpack.c.b16 %v306, %v305
    %v390 = vpack.c.b16 %v308, %v307
    %v391 = vpack.c.b16 %v310, %v309
    %v392 = vpack.c.b16 %v312, %v311
    %v393 = vpack.c.b16 %v314, %v313
    %v394 = vpack.c.b16 %v316, %v315
    %v395 = vpack.c.b16 %v318, %v317
    %v396 = vpack.c.b16 %v320, %v319
    %v397 = vpack.c.b16 %v322, %v321
    %v398 = vpack.c.b16 %v324, %v323
    %v399 = vpack.c.b16 %v326, %v325
    %v400 = vpack.c.b16 %v328, %v327
    %v401 = vpack.c.b16 %v330, %v329
    %v402 = vpack.c.b16 %v332, %v331
    %v403 = vpack.c.b16 %v334, %v333
    %v404 = vpack.c.b16 %v336, %v335
    %v405 = vpack.c.b16 %v338, %v337
    %v406 = vpack.c.b16 %v340, %v339
    %v407 = vpack.c.b16 %v342, %v341
    %v408 = vpack.c.b16 %v344, %v343
    %v409 = vpack.c.b16 %v346, %v345
    %v410 = vpack.c.b16 %v348, %v347
    %v411 = vpack.c.b16 %v350, %v349
    %v412 = vpack.c.b16 %v352, %v351
    %v413 = vpack.c.b16 %v354, %v353
    %v414 = vpack.c.b16 %v356, %v355
    %v415 = vpack.c.b16 %v358, %v357
    %v416 = vpack.c.b16 %v360, %v359
    %v417 = vpack.c.b16 %v362, %v361
    %v418 = vpack.c.b16 %v364, %v363
    %v419 = vpack.c.b16 %v366, %v365
    %v420 = vpack.c.b16 %v368, %v367
    %v421 = vpack.c.b16 %v370, %v369
    %v422 = vpack.c.b16 %v372, %v371
    %v423 = vpack.c.b16 %v374, %v373
    %v424 = vpack.c.b16 %v376, %v375
    %473 = vmatprep.subr.bf16.mxu0 0
    %474 = vmatpush1.bf16.msra.mxu0 %v384
    %475 = vmatprep.subr.bf16.mxu0 0
    %476 = vmatpush1.bf16.msra.mxu0 %v383
    %477 = vmatprep.subr.bf16.mxu0 0
    %478 = vmatpush1.bf16.msra.mxu0 %v382
    %479 = vmatprep.subr.bf16.mxu0 0
    %480 = vmatpush1.bf16.msra.mxu0 %v381
    %481 = vmatprep.subr.bf16.mxu0 0
    %482 = vmatpush1.bf16.msra.mxu0 %v380
    %483 = vmatprep.subr.bf16.mxu0 0
    %484 = vmatpush1.bf16.msra.mxu0 %v379
    %485 = vmatprep.subr.bf16.mxu0 0
    %486 = vmatpush1.bf16.msra.mxu0 %v378
    %487 = vmatprep.subr.bf16.mxu0 0
    %488 = vmatpush1.bf16.msra.mxu0 %v377
    %489 = vmatprep.subr.bf16.mxu0 0
    %490 = vmatpush2.bf16.msra.mxu0 %v392
    %491 = vmatprep.subr.bf16.mxu0 0
    %492 = vmatpush2.bf16.msra.mxu0 %v391
    %493 = vmatprep.subr.bf16.mxu0 0
    %494 = vmatpush2.bf16.msra.mxu0 %v390
    %495 = vmatprep.subr.bf16.mxu0 0
    %496 = vmatpush2.bf16.msra.mxu0 %v389
    %497 = vmatprep.subr.bf16.mxu0 0
    %498 = vmatpush2.bf16.msra.mxu0 %v388
    %499 = vmatprep.subr.bf16.mxu0 0
    %500 = vmatpush2.bf16.msra.mxu0 %v387
    %501 = vmatprep.subr.bf16.mxu0 0
    %502 = vmatpush2.bf16.msra.mxu0 %v386
    %503 = vmatprep.subr.bf16.mxu0 0
    %504 = vmatpush2.bf16.msra.mxu0 %v385
    %505 = vmatprep.mubr.bf16.mxu0 %v82
    %506 = vmatmul.mubr.bf16.gmra.mxu0 %v81
    %v507 = vpop.f32.mrf.mxu0
    %v508 = vadd.f32 0.0, %v507
    %v509 = vpop.f32.mrf.mxu0
    %v510 = vpop.f32.mrf.mxu0
    %v511 = vadd.f32 0.0, %v510
    %v512 = vpop.f32.mrf.mxu0
    %513 = vdwg.mxu0
    %514 = vmatprep.subr.bf16.mxu0 0
    %515 = vmatpush1.bf16.msra.mxu0 %v400
    %516 = vmatprep.subr.bf16.mxu0 0
    %517 = vmatpush1.bf16.msra.mxu0 %v399
    %518 = vmatprep.subr.bf16.mxu0 0
    %519 = vmatpush1.bf16.msra.mxu0 %v398
    %520 = vmatprep.subr.bf16.mxu0 0
    %521 = vmatpush1.bf16.msra.mxu0 %v397
    %522 = vmatprep.subr.bf16.mxu0 0
    %523 = vmatpush1.bf16.msra.mxu0 %v396
    %524 = vmatprep.subr.bf16.mxu0 0
    %525 = vmatpush1.bf16.msra.mxu0 %v395
    %526 = vmatprep.subr.bf16.mxu0 0
    %527 = vmatpush1.bf16.msra.mxu0 %v394
    %528 = vmatprep.subr.bf16.mxu0 0
    %529 = vmatpush1.bf16.msra.mxu0 %v393
    %530 = vmatprep.subr.bf16.mxu0 0
    %531 = vmatpush2.bf16.msra.mxu0 %v408
    %532 = vmatprep.subr.bf16.mxu0 0
    %533 = vmatpush2.bf16.msra.mxu0 %v407
    %534 = vmatprep.subr.bf16.mxu0 0
    %535 = vmatpush2.bf16.msra.mxu0 %v406
    %536 = vmatprep.subr.bf16.mxu0 0
    %537 = vmatpush2.bf16.msra.mxu0 %v405
    %538 = vmatprep.subr.bf16.mxu0 0
    %539 = vmatpush2.bf16.msra.mxu0 %v404
    %540 = vmatprep.subr.bf16.mxu0 0
    %541 = vmatpush2.bf16.msra.mxu0 %v403
    %542 = vmatprep.subr.bf16.mxu0 0
    %543 = vmatpush2.bf16.msra.mxu0 %v402
    %544 = vmatprep.subr.bf16.mxu0 0
    %545 = vmatpush2.bf16.msra.mxu0 %v401
    %546 = vmatprep.mubr.bf16.mxu0 %v84
    %547 = vmatmul.mubr.bf16.gmra.mxu0 %v83
    %v548 = vpop.f32.mrf.mxu0
    %v549 = vadd.f32 %v508, %v548
    %v550 = vpop.f32.mrf.mxu0
    %v551 = vpop.f32.mrf.mxu0
    %v552 = vadd.f32 %v511, %v551
    %v553 = vpop.f32.mrf.mxu0
    %554 = vdwg.mxu0
    %555 = vmatprep.subr.bf16.mxu0 0
    %556 = vmatpush1.bf16.msra.mxu0 %v416
    %557 = vmatprep.subr.bf16.mxu0 0
    %558 = vmatpush1.bf16.msra.mxu0 %v415
    %559 = vmatprep.subr.bf16.mxu0 0
    %560 = vmatpush1.bf16.msra.mxu0 %v414
    %561 = vmatprep.subr.bf16.mxu0 0
    %562 = vmatpush1.bf16.msra.mxu0 %v413
    %563 = vmatprep.subr.bf16.mxu0 0
    %564 = vmatpush1.bf16.msra.mxu0 %v412
    %565 = vmatprep.subr.bf16.mxu0 0
    %566 = vmatpush1.bf16.msra.mxu0 %v411
    %567 = vmatprep.subr.bf16.mxu0 0
    %568 = vmatpush1.bf16.msra.mxu0 %v410
    %569 = vmatprep.subr.bf16.mxu0 0
    %570 = vmatpush1.bf16.msra.mxu0 %v409
    %571 = vmatprep.subr.bf16.mxu0 0
    %572 = vmatpush2.bf16.msra.mxu0 %v424
    %573 = vmatprep.subr.bf16.mxu0 0
    %574 = vmatpush2.bf16.msra.mxu0 %v423
    %575 = vmatprep.subr.bf16.mxu0 0
    %576 = vmatpush2.bf16.msra.mxu0 %v422
    %577 = vmatprep.subr.bf16.mxu0 0
    %578 = vmatpush2.bf16.msra.mxu0 %v421
    %579 = vmatprep.subr.bf16.mxu0 0
    %580 = vmatpush2.bf16.msra.mxu0 %v420
    %581 = vmatprep.subr.bf16.mxu0 0
    %582 = vmatpush2.bf16.msra.mxu0 %v419
    %583 = vmatprep.subr.bf16.mxu0 0
    %584 = vmatpush2.bf16.msra.mxu0 %v418
    %585 = vmatprep.subr.bf16.mxu0 0
    %586 = vmatpush2.bf16.msra.mxu0 %v417
    %587 = vmatprep.mubr.bf16.mxu0 %v86
    %588 = vmatmul.mubr.bf16.gmra.mxu0 %v85
    %v589 = vpop.f32.mrf.mxu0
    %v590 = vadd.f32 %v549, %v589
    %v591 = vpop.f32.mrf.mxu0
    %v592 = vpop.f32.mrf.mxu0
    %v593 = vadd.f32 %v552, %v592
    %v594 = vpop.f32.mrf.mxu0
    %595 = vdwg.mxu0
    %v596 = vadd.f32 %v87, %v590
    %v597 = vadd.f32 %v88, %v593
    %598 = vst [vmem:[#allocation2] sm:$0xff] %v596
    %599 = vst [vmem:[#allocation2 + $0x8] sm:$0xff] %v597
    // Predicated region
    $region38: #{tpu_custom_call.1} parent=1 // pred_check
      %p600 = pneg %p63
    $region39: #{tpu_custom_call.1} parent=1 // pred_check_branch
      %602 = sbr.rel (%p600) target = $region41
    $region40: #{tpu_custom_call.1} parent=1 // pred_region
      %v603 = vld [vmem:[#allocation2] sm:$0xff]
      %v604 = vld [vmem:[#allocation2 + $0x8] sm:$0xff]
      %v605 = vld [vmem:[%s2] sm:$0x1]
      %v607 = vlaneseq
      %v608 = vshrl.u32 %v607, 7
      %v609 = vsub.s32 0, %v608
      %v610 = vrot.slane %v605, %v609
      %v612 = vadd.f32 %v603, %v610
      %v613 = vadd.f32 %v604, %v610
      %v614 = vmax.f32 %v612, 0.0
      %v615 = vmax.f32 %v613, 0.0
      %v616 = vpack.c.bf16 %v615, %v614
      %v617 = vld [vmem:[#allocation8] sm:$0xf]
      %v618 = vld [vmem:[#allocation8 + $0x4] sm:$0xf]
      %v619 = vld [vmem:[#allocation8 + $0x8] sm:$0xf]
      %v620 = vld [vmem:[#allocation8 + $0xc] sm:$0xf]
      %v621 = vld [vmem:[#allocation8 + $0x10] sm:$0xf]
      %v622 = vld [vmem:[#allocation8 + $0x14] sm:$0xf]
      %v623 = vld [vmem:[#allocation8 + $0x18] sm:$0xf]
      %v624 = vld [vmem:[#allocation8 + $0x1c] sm:$0xf]
      %v625 = vld [vmem:[#allocation8 + $0x20] sm:$0xf]
      %v626 = vld [vmem:[#allocation8 + $0x24] sm:$0xf]
      %v627 = vld [vmem:[#allocation8 + $0x28] sm:$0xf]
      %v628 = vld [vmem:[#allocation8 + $0x2c] sm:$0xf]
      %v629 = vld [vmem:[#allocation8 + $0x30] sm:$0xf]
      %v630 = vld [vmem:[#allocation8 + $0x34] sm:$0xf]
      %v631 = vld [vmem:[#allocation8 + $0x38] sm:$0xf]
      %v632 = vld [vmem:[#allocation8 + $0x3c] sm:$0xf]
      %v633 = vld [vmem:[%s4] sm:$0x1]
      %v635 = vlaneseq
      %v636 = vshrl.u32 %v635, 7
      %v637 = vsub.s32 0, %v636
      %v638 = vrot.slane %v633, %v637
      %v656 = vunpack.c.l.b16 %v617
      %v657 = vunpack.c.l.b16 %v618
      %v658 = vunpack.c.l.b16 %v619
      %v659 = vunpack.c.l.b16 %v620
      %v660 = vunpack.c.l.b16 %v621
      %v661 = vunpack.c.l.b16 %v622
      %v662 = vunpack.c.l.b16 %v623
      %v663 = vunpack.c.l.b16 %v624
      %v664 = vunpack.c.l.b16 %v625
      %v665 = vunpack.c.l.b16 %v626
      %v666 = vunpack.c.l.b16 %v627
      %v667 = vunpack.c.l.b16 %v628
      %v668 = vunpack.c.l.b16 %v629
      %v669 = vunpack.c.l.b16 %v630
      %v670 = vunpack.c.l.b16 %v631
      %v671 = vunpack.c.l.b16 %v632
      %v672 = vpack.c.b16 %v657, %v656
      %v673 = vpack.c.b16 %v659, %v658
      %v674 = vpack.c.b16 %v661, %v660
      %v675 = vpack.c.b16 %v663, %v662
      %v676 = vpack.c.b16 %v665, %v664
      %v677 = vpack.c.b16 %v667, %v666
      %v678 = vpack.c.b16 %v669, %v668
      %v679 = vpack.c.b16 %v671, %v670
      %688 = vmatprep.subr.bf16.mxu0 0
      %689 = vmatpush1.bf16.msra.mxu0 %v679
      %690 = vmatprep.subr.bf16.mxu0 0
      %691 = vmatpush1.bf16.msra.mxu0 %v678
      %692 = vmatprep.subr.bf16.mxu0 0
      %693 = vmatpush1.bf16.msra.mxu0 %v677
      %694 = vmatprep.subr.bf16.mxu0 0
      %695 = vmatpush1.bf16.msra.mxu0 %v676
      %696 = vmatprep.subr.bf16.mxu0 0
      %697 = vmatpush1.bf16.msra.mxu0 %v675
      %698 = vmatprep.subr.bf16.mxu0 0
      %699 = vmatpush1.bf16.msra.mxu0 %v674
      %700 = vmatprep.subr.bf16.mxu0 0
      %701 = vmatpush1.bf16.msra.mxu0 %v673
      %702 = vmatprep.subr.bf16.mxu0 0
      %703 = vmatpush1.bf16.msra.mxu0 %v672
      %704 = vmatprep.subr.bf16.mxu0 0
      %705 = vmatpush2.bf16.msra.mxu0 0
      %706 = vmatprep.subr.bf16.mxu0 0
      %707 = vmatpush2.bf16.msra.mxu0 0
      %708 = vmatprep.subr.bf16.mxu0 0
      %709 = vmatpush2.bf16.msra.mxu0 0
      %710 = vmatprep.subr.bf16.mxu0 0
      %711 = vmatpush2.bf16.msra.mxu0 0
      %712 = vmatprep.subr.bf16.mxu0 0
      %713 = vmatpush2.bf16.msra.mxu0 0
      %714 = vmatprep.subr.bf16.mxu0 0
      %715 = vmatpush2.bf16.msra.mxu0 0
      %716 = vmatprep.subr.bf16.mxu0 0
      %717 = vmatpush2.bf16.msra.mxu0 0
      %718 = vmatprep.subr.bf16.mxu0 0
      %719 = vmatpush2.bf16.msra.mxu0 0
      %720 = vmatprep.mubr.bf16.mxu0 0
      %721 = vmatmul.mubr.bf16.gmra.mxu0 %v616
      %v722 = vpop.f32.mrf.mxu0
      %v723 = vadd.f32 %v638, %v722
      %v724 = vpop.f32.mrf.mxu0
      %v725 = vpop.f32.mrf.mxu0
      %v726 = vadd.f32 %v638, %v725
      %v727 = vpop.f32.mrf.mxu0
      %728 = vdwg.mxu0
      %729 = vst [vmem:[#allocation9] sm:$0xff] %v723
      %730 = vst [vmem:[#allocation9 + $0x8] sm:$0xff] %v726
    $region41: #{tpu_custom_call.1} parent=1 // pred_fallthru
      _
    // Predicated region
    $region42: #{tpu_custom_call.1} parent=1 // pred_check
      _
    $region43: #{tpu_custom_call.1} parent=1 // pred_check_branch
      %732 = sbr.rel (0) target = $region45
    $region44: #{tpu_custom_call.1} parent=1 // pred_region
      %s734 = ssub.s32 256, 256
      %735 = vsyncadd [#allocation5], %s734
      %s736 = sshll.u32 [#allocation9], 4
      %s737 = int_to_ptr.vmem [resolvable:$true] %s736
      %742 = dma.vmem_to_hbm [thread:$0]  %s737, 256, %s5, [#allocation5], 128, 128, 8
    $region45: #{tpu_custom_call.1} parent=1 // pred_fallthru
      _
    // Predicated region
    $region46: #{tpu_custom_call.1} parent=1 // pred_check
      _
    $region47: #{tpu_custom_call.1} parent=1 // pred_check_branch
      %744 = sbr.rel (0) target = $region49
    $region48: #{tpu_custom_call.1} parent=1 // pred_region
      %745 = dma.done [#allocation5], 256
    $region49: #{tpu_custom_call.1} parent=1 // pred_fallthru
      _
    %746 = vsyncpa [#allocation4], 1
    %747 = vsyncpa [#allocation7], 1
    %748 = vsyncpa [#allocation5], 1

</llo_original>
